<compile_context>
chip_gen: v5e
topology: v5e:2x2
jax: 0.10.0
libtpu: 0.0.40
codegen_flags: <defaults>
</compile_context>

<pallas_src>
import jax
import jax.numpy as jnp
from jax.experimental import pallas as pl
from jax.experimental.pallas import tpu as pltpu


def _round_up(x, m):
    return ((x + m - 1) // m) * m


def _default_vmem_budget():
    # ~75% of physical VMEM: 128 MiB (v5e/v6e) -> 96 MiB, 64 MiB (v7x) -> 48 MiB.
    try:
        cap = getattr(pltpu.get_tpu_info(), "vmem_capacity_bytes", None)
    except Exception:
        cap = None
    if not cap:
        return 48 << 20
    return int(cap) * 3 // 4


def pw_kernel(x_ref, w_ref, bout_ref, o_ref):
    # x_ref:    (TB, IN)        streamed input row tile
    # w_ref:    (IN, OUT_pad)   weight, pre-transposed once in the wrapper (resident)
    # bout_ref: (1, OUT_pad)    precomputed bias @ W.T, float32 (resident)
    # o_ref:    (TB, OUT_pad)   output tile (lane-dense: OUT_pad % 128 == 0)
    acc = jnp.dot(x_ref[...], w_ref[...], preferred_element_type=jnp.float32)
    o_ref[...] = (acc - bout_ref[...]).astype(o_ref.dtype)


def pw_layer(x, bias, weight, *, tile_b=1024, compute_dtype=None,
             out_dtype=None, vmem_budget_bytes=None):
    """PWLayer forward.

    x:      (..., input_size)
    bias:   (input_size,)
    weight: (output_size, input_size)   (PyTorch nn.Linear layout)
    compute_dtype: optional dtype (e.g. jnp.bfloat16) for the MXU operands;
                   accumulation stays float32.
    out_dtype:     optional output dtype (default: x.dtype).
    """
    orig_shape = x.shape
    IN = orig_shape[-1]
    OUT = weight.shape[0]
    out_dtype = x.dtype if out_dtype is None else jnp.dtype(out_dtype)
    if vmem_budget_bytes is None:
        vmem_budget_bytes = _default_vmem_budget()

    x2 = x.reshape(-1, IN)
    B = x2.shape[0]

    # Hoist the whitening bias through the linear layer: one (OUT,) vector, f32.
    bias_out = (weight.astype(jnp.float32) @ bias.astype(jnp.float32))[None, :]

    # Pre-transpose the weight once (amortized over the whole batch) so the
    # in-kernel contraction needs no per-step transpose.
    w_t = jnp.transpose(weight)                       # (IN, OUT)

    # Lane-dense output: pad OUT to a multiple of 128 (sliced off post-call).
    OUT_pad = _round_up(OUT, 128)
    if OUT_pad != OUT:
        w_t = jnp.pad(w_t, ((0, 0), (0, OUT_pad - OUT)))
        bias_out = jnp.pad(bias_out, ((0, 0), (0, OUT_pad - OUT)))

    # Optional reduced-precision MXU operands (halves x/weight DMA bytes).
    if compute_dtype is not None:
        x2 = x2.astype(compute_dtype)
        w_t = w_t.astype(compute_dtype)

    in_item = jnp.dtype(x2.dtype).itemsize
    out_item = jnp.dtype(out_dtype).itemsize

    # Row granularity follows the sublane packing of the operand dtype.
    gran = 8 if in_item >= 4 else (16 if in_item == 2 else 32)

    # Row tile: start big, shrink only if the VMEM footprint exceeds budget.
    tile = max(gran, min(_round_up(tile_b, gran), _round_up(B, gran)))

    def footprint(t):
        # 2 x-buffers (an optional 3rd is <=512 KiB, inside the 25% headroom),
        # single-buffered resident weight + bias row, double-buffered output.
        return (2 * t * IN * in_item
                + IN * OUT_pad * in_item
                + OUT_pad * 4
                + 2 * t * OUT_pad * out_item)

    while tile > gran and footprint(tile) > vmem_budget_bytes:
        tile = max(gran, _round_up(tile // 2, gran))
    # NOTE: if IN*OUT_pad alone ever exceeds the budget an OUT grid axis would
    # be needed; PWLayer weights (e.g. 768x300) are far below that.

    # Grid-step count: >=2 and even when possible so v7x's two TensorCores
    # both get work under "parallel" semantics; rebalance the tile so steps
    # are equal-sized with minimal row padding (also keeps B_pad a multiple of
    # the packing granularity).
    num_steps = pl.cdiv(B, tile)
    if B > gran:
        num_steps = _round_up(max(num_steps, 2), 2)
    tile = _round_up(pl.cdiv(B, num_steps), gran)
    B_pad = num_steps * tile
    if B_pad != B:
        x2 = jnp.pad(x2, ((0, B_pad - B), (0, 0)))
    grid = (num_steps,)

    # 3-deep x pipeline when the per-step x DMA is tiny (latency-limited).
    small_x_step = tile * IN * in_item <= (512 << 10)

    cost = pl.CostEstimate(
        flops=2 * B_pad * IN * OUT_pad,
        transcendentals=0,
        bytes_accessed=(B_pad * IN * in_item + IN * OUT_pad * in_item
                        + OUT_pad * 4 + B_pad * OUT_pad * out_item),
    )

    def make_call(use_pipeline_modes):
        x_kw, res_kw = {}, {}
        if use_pipeline_modes:
            res_kw = dict(pipeline_mode=pl.Buffered(1))      # resident blocks
            if small_x_step:
                x_kw = dict(pipeline_mode=pl.Buffered(3))
        return pl.pallas_call(
            pw_kernel,
            out_shape=jax.ShapeDtypeStruct((B_pad, OUT_pad), out_dtype),
            grid_spec=pltpu.PrefetchScalarGridSpec(
                num_scalar_prefetch=0,
                grid=grid,
                in_specs=[
                    pl.BlockSpec((tile, IN), lambda i: (i, 0), **x_kw),      # x rows streamed
                    pl.BlockSpec((IN, OUT_pad), lambda i: (0, 0), **res_kw),  # W.T resident
                    pl.BlockSpec((1, OUT_pad), lambda i: (0, 0), **res_kw),   # bias@W.T resident
                ],
                out_specs=pl.BlockSpec((tile, OUT_pad), lambda i: (i, 0)),
            ),
            compiler_params=pltpu.CompilerParams(
                dimension_semantics=("parallel",),            # shard grid across TCs (v7x)
                vmem_limit_bytes=int(vmem_budget_bytes),
            ),
            cost_estimate=cost,
        )

    try:
        out = make_call(True)(x2, w_t, bias_out)
    except Exception:
        # jax build without BlockSpec pipeline_mode support: default buffering.
        out = make_call(False)(x2, w_t, bias_out)

    out = out[:B, :OUT]
    return out.reshape(*orig_shape[:-1], OUT)


def pw_layer_ref(x, bias, weight):
    # Pure-JAX reference of the PyTorch forward (dropout p=0.0 is identity).
    return (x - bias) @ weight.T


if __name__ == "__main__":
    key = jax.random.PRNGKey(0)
    k_x, k_w, k_b = jax.random.split(key, 3)

    # Small shapes consistent with the module: (batch, seq, hidden) token rows.
    batch, seq, input_size, output_size = 8, 25, 32, 64   # 200 rows (ragged vs tile)

    x = jax.random.normal(k_x, (batch, seq, input_size), dtype=jnp.float32)
    # nn.Linear weight init: normal(mean=0, std=0.02); whitening bias non-trivial.
    weight = 0.02 * jax.random.normal(k_w, (output_size, input_size), dtype=jnp.float32)
    bias = 0.1 * jax.random.normal(k_b, (input_size,), dtype=jnp.float32)

    ref = pw_layer_ref(x, bias, weight)

    # f32-operand path (exact module semantics).  200 rows with the forced
    # even-step split exercises a 2-step grid + row padding + OUT padding.
    out_f32 = jax.block_until_ready(pw_layer(x, bias, weight))
    assert out_f32.shape == ref.shape
    assert jnp.allclose(out_f32, ref, atol=3e-3, rtol=3e-2), "f32 path mismatch vs reference"

    # bf16 MXU operands with f32 accumulation — the fast path on v6e/v7x.
    out_bf16 = jax.block_until_ready(
        pw_layer(x, bias, weight, compute_dtype=jnp.bfloat16))
    assert out_bf16.shape == ref.shape
    assert jnp.allclose(out_bf16, ref, atol=1e-2, rtol=5e-2), "bf16 path mismatch vs reference"

    print("KERNEL_OK")
</pallas_src>

<mosaic_0001>
module attributes {stable_mosaic.version = 11 : i64} {
  func.func @pw_kernel(%arg0: i32, %arg1: memref<104x32xf32, #tpu.memory_space<vmem>>, %arg2: memref<32x128xf32, #tpu.memory_space<vmem>>, %arg3: memref<1x128xf32, #tpu.memory_space<vmem>>, %arg4: memref<104x128xf32, #tpu.memory_space<vmem>>) attributes {dimension_semantics = [#tpu.dimension_semantics<parallel>], iteration_bounds = array<i64: 2>, scalar_prefetch = 0 : i64, scratch_operands = 0 : i64, tpu.core_type = #tpu.core_type<tc>, window_params = [{transform_indices = @transform_0, window_bounds = array<i64: 104, 32>}, {pipeline_mode = #tpu.pipeline_mode<synchronous>, transform_indices = @transform_1, window_bounds = array<i64: 32, 128>}, {pipeline_mode = #tpu.pipeline_mode<synchronous>, transform_indices = @transform_2, window_bounds = array<i64: 1, 128>}, {transform_indices = @transform_3, window_bounds = array<i64: 104, 128>}]} {
    %c0 = arith.constant 0 : index
    %c0_0 = arith.constant 0 : index
    %0 = vector.load %arg1[%c0, %c0_0] : memref<104x32xf32, #tpu.memory_space<vmem>>, vector<104x32xf32>
    %c0_1 = arith.constant 0 : index
    %c0_2 = arith.constant 0 : index
    %1 = vector.load %arg2[%c0_1, %c0_2] : memref<32x128xf32, #tpu.memory_space<vmem>>, vector<32x128xf32>
    %cst = arith.constant dense<0.000000e+00> : vector<104x128xf32>
    %2 = tpu.matmul %0, %1, %cst {dimension_numbers = #tpu.dot_dimension_numbers<[1], [0], [0], [1], [0, 0, 1, 1], [], []>} : vector<104x32xf32>, vector<32x128xf32>, vector<104x128xf32> -> vector<104x128xf32>
    %c0_3 = arith.constant 0 : index
    %c0_4 = arith.constant 0 : index
    %3 = vector.load %arg3[%c0_3, %c0_4] : memref<1x128xf32, #tpu.memory_space<vmem>>, vector<1x128xf32>
    %4 = vector.broadcast %3 : vector<1x128xf32> to vector<104x128xf32>
    %5 = arith.subf %2, %4 : vector<104x128xf32>
    %c0_5 = arith.constant 0 : index
    %c0_6 = arith.constant 0 : index
    %6 = vector.load %arg4[%c0_5, %c0_6] : memref<104x128xf32, #tpu.memory_space<vmem>>, vector<104x128xf32>
    tpu.vector_store %arg4[%c0_5, %c0_6], %5 {strides = array<i32>} : memref<104x128xf32, #tpu.memory_space<vmem>>, vector<104x128xf32>,
    return
  }
  func.func @transform_0(%arg0: i32) -> (i32, i32) {
    %c0_i32 = arith.constant 0 : i32
    %c0_i32_0 = arith.constant 0 : i32
    return %arg0, %c0_i32 : i32, i32
  }
  func.func @transform_1(%arg0: i32) -> (i32, i32) {
    %c0_i32 = arith.constant 0 : i32
    %c0_i32_0 = arith.constant 0 : i32
    %c0_i32_1 = arith.constant 0 : i32
    return %c0_i32, %c0_i32_0 : i32, i32
  }
  func.func @transform_2(%arg0: i32) -> (i32, i32) {
    %c0_i32 = arith.constant 0 : i32
    %c0_i32_0 = arith.constant 0 : i32
    %c0_i32_1 = arith.constant 0 : i32
    return %c0_i32, %c0_i32_0 : i32, i32
  }
  func.func @transform_3(%arg0: i32) -> (i32, i32) {
    %c0_i32 = arith.constant 0 : i32
    %c0_i32_0 = arith.constant 0 : i32
    return %arg0, %c0_i32 : i32, i32
  }
}

</mosaic_0001>

<llo_original>
// kernel: tpu_custom_call.1
$region0: #{tpu_custom_call.1}
  #allocation0 [shape = 'u32[]', space=smem, size = 0x4, offset = 0x4, fixed_abs, tag = 'smem constant byte address 0x4 - core index']
  #allocation1 [shape = 'u32[72,128]{1,0:T(1,128)}', space=vmem, size = 0x9000, scoped, tag = 'internal scratch']
  %s0 = inlined_call_operand.vmem [shape: f32[208,32], index: 0, kind: input, shape index: {}]
  %s1 = inlined_call_operand.vmem [shape: f32[32,128], index: 1, kind: input, shape index: {}]
  %s2 = inlined_call_operand.vmem [shape: f32[1,128], index: 2, kind: input, shape index: {}]
  %s3 = inlined_call_operand.hbm [shape: f32[208,128], index: 3, kind: output, shape index: {}]
  %s4 = sld [smem:[#allocation0]]
  $region45: #{tpu_custom_call.1} parent=0
    _
  %s6 = ssub.s32 1, %s4
  %s7 = scalar_select 0, %s6, %s4
  $region1: #{tpu_custom_call.1} parent=0
    #allocation2 [shape = 'u8[106496]{0}', space=vmem, size = 0x1a000, scoped, tag = 'output window, operand 0']
    #allocation3 [shape = 's32[2]{0}', space=sflag, size = 0x8, scoped, tag = 'scoped memory for tpu_custom_call.1']
    %8 = vsyncpa [#allocation3], 0
    %s9 = scalar_lea.sflag [#allocation3], 1
    %10 = vsyncpa %s9, 0
    loop: start=0, step=1, limit=4
    $region2: #{tpu_custom_call.1} parent=1 // loop_pre_header
      _
    $region3: #{tpu_custom_call.1} parent=1 // loop_header
      %s12 = sphi 0, %s16
      %p13 = scmp.ge.s32.totalorder %s12, 4
      %s22 = sphi 0, %s24
      %s25 = sphi 0, %s22
      %s26 = sphi 0, %s25
      %s42 = sphi 0, %s26
      %s46 = sphi 0, %s46
      %s48 = sphi 0, %s46
      %s49 = sphi 0, %s48
      %s63 = sphi 0, %s49
      %s67 = sphi 0, %s67
      %s69 = sphi 0, %s67
      %s70 = sphi 0, %s69
      %s84 = sphi 0, %s70
      %s90 = sphi 0, %s92
      %s93 = sphi 0, %s90
      %s94 = sphi 0, %s93
      %s110 = sphi 0, %s94
    $region4: #{tpu_custom_call.1} parent=1 // loop_header_branch
      %15 = sbr.rel (%p13) target = $region8
    $region5: #{tpu_custom_call.1} parent=1 // loop_body
      %s17 = ssub.s32 %s12, 1
      %s18 = ssub.s32 %s12, 2
      %s19 = sadd.s32 %s12, 1
      %s20 = ssub.s32 %s12, %s19
      %p21 = scmp.eq.s32.totalorder %s20, 0
      %s23 = sadd.s32 %s22, 1
      %s24 = scalar_select %p21, %s22, %s23
      %p27 = pneg %p21
      %p28 = scmp.eq.s32.totalorder %s12, 1
      %p29 = por %p27, %p28
      %p30 = scmp.ne.s32.totalorder %s22, %s25
      %p31 = scmp.eq.s32.totalorder %s12, 0
      %p32 = por %p30, %p31
      %p33 = scmp.ne.s32.totalorder %s22, %s25
      %p34 = scmp.eq.s32.totalorder %s17, 1
      %p35 = por %p33, %p34
      %p36 = scmp.ne.s32.totalorder %s25, %s26
      %p37 = scmp.eq.s32.totalorder %s17, 0
      %p38 = por %p36, %p37
      %p39 = scmp.ne.s32.totalorder %s25, %s26
      %p40 = scmp.eq.s32.totalorder %s18, 1
      %p41 = por %p39, %p40
      %p43 = scmp.ne.s32.totalorder %s26, %s42
      %p44 = scmp.eq.s32.totalorder %s18, 0
      %p45 = por %p43, %p44
      %s47 = sadd.s32 %s46, 1
      %p50 = scmp.eq.s32.totalorder %s12, 1
      %p51 = scmp.ne.s32.totalorder %s46, %s48
      %p52 = scmp.eq.s32.totalorder %s12, 0
      %p53 = por %p51, %p52
      %p54 = scmp.ne.s32.totalorder %s46, %s48
      %p55 = scmp.eq.s32.totalorder %s17, 1
      %p56 = por %p54, %p55
      %p57 = scmp.ne.s32.totalorder %s48, %s49
      %p58 = scmp.eq.s32.totalorder %s17, 0
      %p59 = por %p57, %p58
      %p60 = scmp.ne.s32.totalorder %s48, %s49
      %p61 = scmp.eq.s32.totalorder %s18, 1
      %p62 = por %p60, %p61
      %p64 = scmp.ne.s32.totalorder %s49, %s63
      %p65 = scmp.eq.s32.totalorder %s18, 0
      %p66 = por %p64, %p65
      %s68 = sadd.s32 %s67, 1
      %p71 = scmp.eq.s32.totalorder %s12, 1
      %p72 = scmp.ne.s32.totalorder %s67, %s69
      %p73 = scmp.eq.s32.totalorder %s12, 0
      %p74 = por %p72, %p73
      %p75 = scmp.ne.s32.totalorder %s67, %s69
      %p76 = scmp.eq.s32.totalorder %s17, 1
      %p77 = por %p75, %p76
      %p78 = scmp.ne.s32.totalorder %s69, %s70
      %p79 = scmp.eq.s32.totalorder %s17, 0
      %p80 = por %p78, %p79
      %p81 = scmp.ne.s32.totalorder %s69, %s70
      %p82 = scmp.eq.s32.totalorder %s18, 1
      %p83 = por %p81, %p82
      %p85 = scmp.ne.s32.totalorder %s70, %s84
      %p86 = scmp.eq.s32.totalorder %s18, 0
      %p87 = por %p85, %p86
      %s88 = ssub.s32 %s12, %s19
      %p89 = scmp.eq.s32.totalorder %s88, 0
      %s91 = sadd.s32 %s90, 1
      %s92 = scalar_select %p89, %s90, %s91
      %p95 = pneg %p89
      %p96 = scmp.eq.s32.totalorder %s12, 1
      %p97 = por %p95, %p96
      %p98 = scmp.ne.s32.totalorder %s90, %s93
      %p99 = scmp.eq.s32.totalorder %s12, 0
      %p100 = por %p98, %p99
      %p101 = scmp.ne.s32.totalorder %s90, %s93
      %p102 = scmp.eq.s32.totalorder %s17, 1
      %p103 = por %p101, %p102
      %p104 = scmp.ne.s32.totalorder %s93, %s94
      %p105 = scmp.eq.s32.totalorder %s17, 0
      %p106 = por %p104, %p105
      %p107 = scmp.ne.s32.totalorder %s93, %s94
      %p108 = scmp.eq.s32.totalorder %s18, 1
      %p109 = por %p107, %p108
      %p111 = scmp.ne.s32.totalorder %s94, %s110
      %p112 = scmp.eq.s32.totalorder %s18, 0
      %p113 = por %p111, %p112
      %p114 = scmp.le.s32.totalorder 1, %s12
      %p115 = scmp.lt.s32.totalorder %s12, 3
      %p116 = pnand %p114, %p115
      %p117 = pneg %p116
      // Predicated region
      $region9: #{tpu_custom_call.1} parent=5 // pred_check
        _
      $region10: #{tpu_custom_call.1} parent=5 // pred_check_branch
        %119 = sbr.rel (%p116) target = $region12
      $region11: #{tpu_custom_call.1} parent=5 // pred_region
        %s120 = ssub.s32 %s12, 1
        // Predicated region
        $region13: #{tpu_custom_call.1} parent=11 // pred_check
          %p121 = pneg %p59
        $region14: #{tpu_custom_call.1} parent=11 // pred_check_branch
          %123 = sbr.rel (%p121) target = $region16
        $region15: #{tpu_custom_call.1} parent=11 // pred_region
          _
        $region16: #{tpu_custom_call.1} parent=11 // pred_fallthru
          _
        // Predicated region
        $region17: #{tpu_custom_call.1} parent=11 // pred_check
          %p124 = pneg %p80
        $region18: #{tpu_custom_call.1} parent=11 // pred_check_branch
          %126 = sbr.rel (%p124) target = $region20
        $region19: #{tpu_custom_call.1} parent=11 // pred_region
          _
        $region20: #{tpu_custom_call.1} parent=11 // pred_fallthru
          _
      $region12: #{tpu_custom_call.1} parent=5 // pred_fallthru
        _
      %p127 = scmp.lt.s32.totalorder %s12, 2
      // Predicated region
      $region21: #{tpu_custom_call.1} parent=5 // pred_check
        %p128 = pneg %p127
      $region22: #{tpu_custom_call.1} parent=5 // pred_check_branch
        %130 = sbr.rel (%p128) target = $region24
      $region23: #{tpu_custom_call.1} parent=5 // pred_region
        // Predicated region
        $region25: #{tpu_custom_call.1} parent=23 // pred_check
          %p131 = pneg %p32
        $region26: #{tpu_custom_call.1} parent=23 // pred_check_branch
          %133 = sbr.rel (%p131) target = $region28
        $region27: #{tpu_custom_call.1} parent=23 // pred_region
          %s134 = smul.u32 13, %s12
          %p135 = scmp.lt.s32.totalorder %s134, 25
          %s136 = scalar_select %p135, %s134, 25
          %s137 = smul.addr %s136, 8
          %s138 = scalar_lea.vmem %s0, %s137
          %s139 = smul.u32 13, %s12
        $region28: #{tpu_custom_call.1} parent=23 // pred_fallthru
          _
      $region24: #{tpu_custom_call.1} parent=5 // pred_fallthru
        _
      %p140 = scmp.le.s32.totalorder 1, %s12
      %p141 = scmp.lt.s32.totalorder %s12, 3
      %p142 = pnand %p140, %p141
      %p143 = pneg %p142
      // Predicated region
      $region29: #{tpu_custom_call.1} parent=5 // pred_check
        _
      $region30: #{tpu_custom_call.1} parent=5 // pred_check_branch
        %145 = sbr.rel (%p142) target = $region32
      $region31: #{tpu_custom_call.1} parent=5 // pred_region
        %s146 = ssub.s32 %s12, 1
        %s147 = smul.u32 13, %s17
        %p148 = scmp.lt.s32.totalorder %s147, 25
        %s149 = scalar_select %p148, %s147, 25
        %s150 = smul.addr %s149, 8
        %s151 = scalar_lea.vmem %s0, %s150
        %p152 = pneg %p38
        %p153 = pneg %p35
        %p154 = pneg %p59
        %p155 = pneg %p56
        %p156 = pneg %p80
        %p157 = pneg %p77
        %p158 = pneg %p106
        %p159 = pneg %p103
        %s160 = sand.u32 %s93, 1
        %s161 = scalar_lea.sflag [#allocation3], %s160
        %s162 = sand.u32 %s93, 1
        %s163 = smul.addr %s162, 104
        %s164 = scalar_lea.vmem [#allocation2], %s163
        %s165 = smul.u32 13, %s17
        %p166 = scmp.lt.s32.totalorder %s165, 25
        %s167 = scalar_select %p166, %s165, 25
        %s168 = smul.addr %s167, 8
        %s169 = scalar_lea.vmem %s0, %s168
        %s170 = smul.u32 13, %s17
        %s171 = smul.u32 13, %s17
        %v172 = vld [vmem:[%s169] sm:$0xff]
        %v173 = vld [vmem:[%s169 + $0x8] sm:$0xff]
        %v174 = vld [vmem:[%s169 + $0x10] sm:$0xff]
        %v175 = vld [vmem:[%s169 + $0x18] sm:$0xff]
        %v176 = vld [vmem:[%s169 + $0x20] sm:$0xff]
        %v177 = vld [vmem:[%s169 + $0x28] sm:$0xff]
        %v178 = vld [vmem:[%s169 + $0x30] sm:$0xff]
        %v179 = vld [vmem:[%s169 + $0x38] sm:$0xff]
        %v180 = vld [vmem:[%s169 + $0x40] sm:$0xff]
        %v181 = vld [vmem:[%s169 + $0x48] sm:$0xff]
        %v182 = vld [vmem:[%s169 + $0x50] sm:$0xff]
        %v183 = vld [vmem:[%s169 + $0x58] sm:$0xff]
        %v184 = vld [vmem:[%s169 + $0x60] sm:$0xff]
        %v185 = vld [vmem:[%s1] sm:$0xff]
        %v186 = vld [vmem:[%s1 + $0x8] sm:$0xff]
        %v187 = vld [vmem:[%s1 + $0x10] sm:$0xff]
        %v188 = vld [vmem:[%s1 + $0x18] sm:$0xff]
        %vm189 = vcmask 261120
        %v191 = vsel %vm189, %v172, 0
        %v194 = vsel %vm189, %v173, 0
        %v197 = vsel %vm189, %v174, 0
        %v200 = vsel %vm189, %v175, 0
        %v203 = vsel %vm189, %v176, 0
        %v206 = vsel %vm189, %v177, 0
        %v209 = vsel %vm189, %v178, 0
        %v212 = vsel %vm189, %v179, 0
        %v215 = vsel %vm189, %v180, 0
        %v218 = vsel %vm189, %v181, 0
        %v221 = vsel %vm189, %v182, 0
        %v224 = vsel %vm189, %v183, 0
        %v227 = vsel %vm189, %v184, 0
        %229 = vmatpush.msra.mxu0 0.0
        %230 = vmatpush.msra.mxu0 0.0
        %231 = vmatpush.msra.mxu0 0.0
        %232 = vmatpush.msra.mxu0 0.0
        %233 = vmatpush.msra.mxu0 0.0
        %234 = vmatpush.msra.mxu0 0.0
        %235 = vmatpush.msra.mxu0 0.0
        %236 = vmatpush.msra.mxu0 0.0
        %237 = vmatpush.msra.mxu0 0.0
        %238 = vmatpush.msra.mxu0 0.0
        %239 = vmatpush.msra.mxu0 0.0
        %240 = vmatpush.msra.mxu0 0.0
        %241 = vmatpush.msra.mxu0 %v188
        %242 = vmatpush.msra.mxu0 %v187
        %243 = vmatpush.msra.mxu0 %v186
        %244 = vmatpush.msra.mxu0 %v185
        %245 = vmatmul.f32.gmra.mxu0 %v191
        %v246 = vpop.f32.mrf.mxu0
        %v247 = vadd.f32 0.0, %v246
        %248 = vmatmul.f32.gmra.mxu0 %v194
        %v249 = vpop.f32.mrf.mxu0
        %v250 = vadd.f32 0.0, %v249
        %251 = vmatmul.f32.gmra.mxu0 %v197
        %v252 = vpop.f32.mrf.mxu0
        %v253 = vadd.f32 0.0, %v252
        %254 = vmatmul.f32.gmra.mxu0 %v200
        %v255 = vpop.f32.mrf.mxu0
        %v256 = vadd.f32 0.0, %v255
        %257 = vmatmul.f32.gmra.mxu0 %v203
        %v258 = vpop.f32.mrf.mxu0
        %v259 = vadd.f32 0.0, %v258
        %260 = vmatmul.f32.gmra.mxu0 %v206
        %v261 = vpop.f32.mrf.mxu0
        %v262 = vadd.f32 0.0, %v261
        %263 = vmatmul.f32.gmra.mxu0 %v209
        %v264 = vpop.f32.mrf.mxu0
        %v265 = vadd.f32 0.0, %v264
        %266 = vmatmul.f32.gmra.mxu0 %v212
        %v267 = vpop.f32.mrf.mxu0
        %v268 = vadd.f32 0.0, %v267
        %269 = vmatmul.f32.gmra.mxu0 %v215
        %v270 = vpop.f32.mrf.mxu0
        %v271 = vadd.f32 0.0, %v270
        %272 = vmatmul.f32.gmra.mxu0 %v218
        %v273 = vpop.f32.mrf.mxu0
        %v274 = vadd.f32 0.0, %v273
        %275 = vmatmul.f32.gmra.mxu0 %v221
        %v276 = vpop.f32.mrf.mxu0
        %v277 = vadd.f32 0.0, %v276
        %278 = vmatmul.f32.gmra.mxu0 %v224
        %v279 = vpop.f32.mrf.mxu0
        %v280 = vadd.f32 0.0, %v279
        %281 = vmatmul.f32.gmra.mxu0 %v227
        %v282 = vpop.f32.mrf.mxu0
        %v283 = vadd.f32 0.0, %v282
        %284 = vdwg.mxu0
        %v285 = vld [vmem:[%s2] sm:$0x1]
        %v287 = vperm.slane %v285, 0
        %v289 = vsub.f32 %v247, %v287
        %v290 = vsub.f32 %v250, %v287
        %v291 = vsub.f32 %v253, %v287
        %v292 = vsub.f32 %v256, %v287
        %v293 = vsub.f32 %v259, %v287
        %v294 = vsub.f32 %v262, %v287
        %v295 = vsub.f32 %v265, %v287
        %v296 = vsub.f32 %v268, %v287
        %v297 = vsub.f32 %v271, %v287
        %v298 = vsub.f32 %v274, %v287
        %v299 = vsub.f32 %v277, %v287
        %v300 = vsub.f32 %v280, %v287
        %v301 = vsub.f32 %v283, %v287
        %302 = vst [vmem:[%s164] sm:$0xff] %v289
        %303 = vst [vmem:[%s164 + $0x8] sm:$0xff] %v290
        %304 = vst [vmem:[%s164 + $0x10] sm:$0xff] %v291
        %305 = vst [vmem:[%s164 + $0x18] sm:$0xff] %v292
        %306 = vst [vmem:[%s164 + $0x20] sm:$0xff] %v293
        %307 = vst [vmem:[%s164 + $0x28] sm:$0xff] %v294
        %308 = vst [vmem:[%s164 + $0x30] sm:$0xff] %v295
        %309 = vst [vmem:[%s164 + $0x38] sm:$0xff] %v296
        %310 = vst [vmem:[%s164 + $0x40] sm:$0xff] %v297
        %311 = vst [vmem:[%s164 + $0x48] sm:$0xff] %v298
        %312 = vst [vmem:[%s164 + $0x50] sm:$0xff] %v299
        %313 = vst [vmem:[%s164 + $0x58] sm:$0xff] %v300
        %314 = vst [vmem:[%s164 + $0x60] sm:$0xff] %v301
        %s315 = sand.u32 %s93, 1
        %s316 = scalar_lea.sflag [#allocation3], %s315
        %s317 = sand.u32 %s93, 1
        %s318 = smul.addr %s317, 104
        %s319 = scalar_lea.vmem [#allocation2], %s318
        // Predicated region
        $region33: #{tpu_custom_call.1} parent=31 // pred_check
          %p320 = pneg %p103
        $region34: #{tpu_custom_call.1} parent=31 // pred_check_branch
          %322 = sbr.rel (%p320) target = $region36
        $region35: #{tpu_custom_call.1} parent=31 // pred_region
          %s323 = smul.u32 13, %s17
          %325 = vsyncadd %s316, 0
          %s326 = smul.addr %s323, 8
          %s327 = scalar_lea.hbm %s3, %s326
          %s328 = sshll.u32 %s319, 4
          %s329 = int_to_ptr.vmem [resolvable:$true] %s328
          %s330 = sshll.u32 %s327, 4
          %s331 = int_to_ptr.hbm [resolvable:$true] %s330
          %336 = dma.vmem_to_hbm [thread:$0]  %s329, 1664, %s331, %s316, 128, 128, 8
        $region36: #{tpu_custom_call.1} parent=31 // pred_fallthru
          _
      $region32: #{tpu_custom_call.1} parent=5 // pred_fallthru
        _
      %p337 = scmp.le.s32.totalorder 2, %s12
      // Predicated region
      $region37: #{tpu_custom_call.1} parent=5 // pred_check
        %p338 = pneg %p337
      $region38: #{tpu_custom_call.1} parent=5 // pred_check_branch
        %340 = sbr.rel (%p338) target = $region40
      $region39: #{tpu_custom_call.1} parent=5 // pred_region
        %s341 = ssub.s32 %s12, 2
        // Predicated region
        $region41: #{tpu_custom_call.1} parent=39 // pred_check
          %p342 = pneg %p109
        $region42: #{tpu_custom_call.1} parent=39 // pred_check_branch
          %344 = sbr.rel (%p342) target = $region44
        $region43: #{tpu_custom_call.1} parent=39 // pred_region
          %s345 = sand.u32 %s94, 1
          %s346 = scalar_lea.sflag [#allocation3], %s345
          %s347 = sand.u32 %s94, 1
          %s348 = smul.addr %s347, 104
          %s349 = scalar_lea.vmem [#allocation2], %s348
          %351 = dma.done %s346, 1664
        $region44: #{tpu_custom_call.1} parent=39 // pred_fallthru
          _
      $region40: #{tpu_custom_call.1} parent=5 // pred_fallthru
        _
    $region6: #{tpu_custom_call.1} parent=1 // loop_footer
      %s16 = sadd.s32 1, %s12
    $region7: #{tpu_custom_call.1} parent=1 // loop_footer_branch
      %11 = sbr.rel target = $region3
    $region8: #{tpu_custom_call.1} parent=1 // loop_exit
      _
    %352 = vsyncpa [#allocation3], 1
    %s353 = scalar_lea.sflag [#allocation3], 1
    %354 = vsyncpa %s353, 1

</llo_original>
